<compile_context>
chip_gen: v5e
topology: v5e:2x2
jax: 0.10.0
libtpu: 0.0.40
codegen_flags: <defaults>
</compile_context>

<pallas_src>
import functools

import jax
import jax.numpy as jnp
from jax.experimental import pallas as pl
from jax.experimental.pallas import tpu as pltpu


def _vocab_parallel_gather_kernel(ids_smem, ids_ref, w_hbm, out_ref,
                                  rows, sems, *, vocab, tile_n):
    # ids_smem: (N_pad,)    int32 SMEM (scalar prefetch) — drives DMA addressing
    # ids_ref:  (TILE_N, 1) int32 VMEM block — vectorized validity mask
    # w_hbm:    (V, D)      embedding table, left in HBM (no auto-DMA)
    # out_ref:  (TILE_N, D) VMEM output block for this token tile
    # rows:     (TILE_N, D) VMEM staging buffer for the gathered rows
    # sems:     (TILE_N,)   one DMA semaphore per row copy
    base = pl.program_id(0) * tile_n

    # 1) Issue every row-fetch DMA for this tile up front (maximum overlap).
    for i in range(tile_n):
        tok = ids_smem[base + i]
        valid = (tok >= 0) & (tok < vocab)
        safe = jnp.where(valid, tok, 0)          # clamp so the DMA stays in-bounds
        pltpu.make_async_copy(
            w_hbm.at[pl.ds(safe, 1), :],         # one (1, D) embedding row in HBM
            rows.at[pl.ds(i, 1), :],             # staged into VMEM
            sems.at[i],
        ).start()

    # 2) Drain the DMAs.  Waits only need matching transfer shapes, so use a
    #    fixed src slice — no SMEM scalar reads after a wait.
    for i in range(tile_n):
        pltpu.make_async_copy(
            w_hbm.at[pl.ds(0, 1), :],
            rows.at[pl.ds(i, 1), :],
            sems.at[i],
        ).wait()

    # 3) Zero rows whose id is outside the global vocab with a single
    #    vectorized select — exactly what per-partition masking + the TP
    #    all-reduce produces.
    ids_tile = ids_ref[...]                                  # (TILE_N, 1)
    valid = (ids_tile >= 0) & (ids_tile < vocab)
    out_ref[...] = jnp.where(valid, rows[...], jnp.zeros_like(rows[...]))


def vocab_parallel_embedding(ids, weight_parts, *, tile_n=8):
    """ids: (B, S) int32; weight_parts: (TP, Vp, D) -> (B, S, D).

    Equals the VocabParallelEmbedding1D forward after the tensor-parallel
    all-reduce (full-table gather; rows for ids outside [0, V) are zero).
    """
    tp, vp, d = weight_parts.shape
    vocab = tp * vp
    b, s = ids.shape
    n = b * s

    # Pad the token count to a multiple of the tile (padded slots gather row 0
    # and are sliced away afterwards).
    n_pad = pl.cdiv(n, tile_n) * tile_n
    ids_flat = ids.reshape(n).astype(jnp.int32)
    if n_pad != n:
        ids_flat = jnp.pad(ids_flat, (0, n_pad - n))
    ids_col = ids_flat.reshape(n_pad, 1)

    # Contiguous vocab partitions concatenate back to the full table, so the
    # global token id is directly the row index of the reshaped table.
    w_full = weight_parts.reshape(vocab, d)

    kernel = functools.partial(
        _vocab_parallel_gather_kernel, vocab=vocab, tile_n=tile_n)

    out = pl.pallas_call(
        kernel,
        out_shape=jax.ShapeDtypeStruct((n_pad, d), weight_parts.dtype),
        grid_spec=pltpu.PrefetchScalarGridSpec(
            num_scalar_prefetch=1,                       # ids -> SMEM
            grid=(n_pad // tile_n,),                     # token tiles
            in_specs=[
                pl.BlockSpec((tile_n, 1), lambda t, ids: (t, 0)),  # ids (VMEM)
                pl.BlockSpec(memory_space=pl.ANY),                 # table (HBM)
            ],
            out_specs=pl.BlockSpec((tile_n, d), lambda t, ids: (t, 0)),
            scratch_shapes=[
                pltpu.VMEM((tile_n, d), weight_parts.dtype),  # gathered rows
                pltpu.SemaphoreType.DMA((tile_n,)),           # one sem per row DMA
            ],
        ),
        compiler_params=pltpu.CompilerParams(
            # token tiles are independent -> "parallel" lets v7x's two
            # TensorCores split them (no effect on single-TC v5e/v6e).
            dimension_semantics=("parallel",),
        ),
    )(ids_flat, ids_col, w_full)

    return out[:n].reshape(b, s, d)


if __name__ == "__main__":
    # Small, deterministic setup consistent with the module:
    #   num_embeddings (vocab) = 64, embedding_dim = 32, tensor_parallel_size = 2
    #   input: token ids of shape (batch=2, seq=8)
    vocab_size = 64
    embed_dim = 32
    tp = 2
    vp = vocab_size // tp                     # num_embeddings_per_partition

    key = jax.random.PRNGKey(0)
    k_w, k_ids = jax.random.split(key)

    # init.uniform_(weight, -1, 1) — full table, split along vocab into TP parts
    full_weight = jax.random.uniform(
        k_w, (vocab_size, embed_dim), dtype=jnp.float32, minval=-1.0, maxval=1.0)
    weight_parts = full_weight.reshape(tp, vp, embed_dim)

    ids = jax.random.randint(k_ids, (2, 8), 0, vocab_size, dtype=jnp.int32)

    out = vocab_parallel_embedding(ids, weight_parts, tile_n=8)
    out = jax.block_until_ready(out)

    # Reference: plain embedding lookup on the full table (what the TP-sum equals).
    ref = jnp.take(full_weight, ids, axis=0)
    assert out.shape == (2, 8, embed_dim), out.shape
    assert jnp.allclose(out, ref, atol=1e-6), "mismatch vs reference embedding"

    # TODO(synk): the real reduce_input is a cross-device all-reduce; here all TP
    # partitions live on one device, so the mathematically identical full gather
    # is computed instead of issuing remote DMAs.

    print("KERNEL_OK")
</pallas_src>

<mosaic_0001>
module attributes {stable_mosaic.version = 11 : i64} {
  func.func @_vocab_parallel_gather_kernel(%arg0: i32, %arg1: memref<16xi32, #tpu.memory_space<smem>>, %arg2: memref<8x1xi32, #tpu.memory_space<vmem>>, %arg3: memref<64x32xf32, #tpu.memory_space<any>>, %arg4: memref<8x32xf32, #tpu.memory_space<vmem>>, %arg5: memref<8x32xf32, #tpu.memory_space<vmem>>, %arg6: memref<8x!tpu.dma_semaphore, #tpu.memory_space<semaphore_mem>>) attributes {dimension_semantics = [#tpu.dimension_semantics<parallel>], iteration_bounds = array<i64: 2>, scalar_prefetch = 1 : i64, scratch_operands = 2 : i64, tpu.core_type = #tpu.core_type<tc>, window_params = [{transform_indices = @transform_0, window_bounds = array<i64: 8, 1>}, {}, {transform_indices = @transform_2, window_bounds = array<i64: 8, 32>}]} {
    %c8_i32 = arith.constant 8 : i32
    %0 = arith.muli %arg0, %c8_i32 : i32
    %c0_i32 = arith.constant 0 : i32
    %1 = arith.addi %0, %c0_i32 : i32
    %2 = arith.index_cast %1 : i32 to index
    %3 = memref.load %arg1[%2] : memref<16xi32, #tpu.memory_space<smem>>
    %c0_i32_0 = arith.constant 0 : i32
    %4 = arith.cmpi sge, %3, %c0_i32_0 : i32
    %c64_i32 = arith.constant 64 : i32
    %5 = arith.cmpi slt, %3, %c64_i32 : i32
    %6 = arith.andi %4, %5 : i1
    %c0_i32_1 = arith.constant 0 : i32
    %7 = arith.select %6, %3, %c0_i32_1 : i32
    %c0_i32_2 = arith.constant 0 : i32
    %c0_i32_3 = arith.constant 0 : i32
    %8 = tpu.memref_slice %arg3[%7, %c0_i32_3] : memref<64x32xf32, #tpu.memory_space<any>> -> memref<1x32xf32, #tpu.memory_space<any>>
    %c0_i32_4 = arith.constant 0 : i32
    %c0_i32_5 = arith.constant 0 : i32
    %9 = tpu.memref_slice %arg5[%c0_i32_4, %c0_i32_5] : memref<8x32xf32, #tpu.memory_space<vmem>> -> memref<1x32xf32, #tpu.memory_space<vmem>>
    %10 = tpu.memref_slice %arg6[%c0_i32_2] : memref<8x!tpu.dma_semaphore, #tpu.memory_space<semaphore_mem>> -> memref<1x!tpu.dma_semaphore, #tpu.memory_space<semaphore_mem>>
    %11 = tpu.memref_squeeze %10 : memref<1x!tpu.dma_semaphore, #tpu.memory_space<semaphore_mem>> -> memref<!tpu.dma_semaphore, #tpu.memory_space<semaphore_mem>>
    tpu.enqueue_dma source(%8 : memref<1x32xf32, #tpu.memory_space<any>>) target(%9 : memref<1x32xf32, #tpu.memory_space<vmem>>) target_semaphore(%11 : memref<!tpu.dma_semaphore, #tpu.memory_space<semaphore_mem>>)
    %c1_i32 = arith.constant 1 : i32
    %12 = arith.addi %0, %c1_i32 : i32
    %13 = arith.index_cast %12 : i32 to index
    %14 = memref.load %arg1[%13] : memref<16xi32, #tpu.memory_space<smem>>
    %c0_i32_6 = arith.constant 0 : i32
    %15 = arith.cmpi sge, %14, %c0_i32_6 : i32
    %c64_i32_7 = arith.constant 64 : i32
    %16 = arith.cmpi slt, %14, %c64_i32_7 : i32
    %17 = arith.andi %15, %16 : i1
    %c0_i32_8 = arith.constant 0 : i32
    %18 = arith.select %17, %14, %c0_i32_8 : i32
    %c1_i32_9 = arith.constant 1 : i32
    %c0_i32_10 = arith.constant 0 : i32
    %19 = tpu.memref_slice %arg3[%18, %c0_i32_10] : memref<64x32xf32, #tpu.memory_space<any>> -> memref<1x32xf32, #tpu.memory_space<any>>
    %c1_i32_11 = arith.constant 1 : i32
    %c0_i32_12 = arith.constant 0 : i32
    %20 = tpu.memref_slice %arg5[%c1_i32_11, %c0_i32_12] : memref<8x32xf32, #tpu.memory_space<vmem>> -> memref<1x32xf32, #tpu.memory_space<vmem>>
    %21 = tpu.memref_slice %arg6[%c1_i32_9] : memref<8x!tpu.dma_semaphore, #tpu.memory_space<semaphore_mem>> -> memref<1x!tpu.dma_semaphore, #tpu.memory_space<semaphore_mem>>
    %22 = tpu.memref_squeeze %21 : memref<1x!tpu.dma_semaphore, #tpu.memory_space<semaphore_mem>> -> memref<!tpu.dma_semaphore, #tpu.memory_space<semaphore_mem>>
    tpu.enqueue_dma source(%19 : memref<1x32xf32, #tpu.memory_space<any>>) target(%20 : memref<1x32xf32, #tpu.memory_space<vmem>>) target_semaphore(%22 : memref<!tpu.dma_semaphore, #tpu.memory_space<semaphore_mem>>)
    %c2_i32 = arith.constant 2 : i32
    %23 = arith.addi %0, %c2_i32 : i32
    %24 = arith.index_cast %23 : i32 to index
    %25 = memref.load %arg1[%24] : memref<16xi32, #tpu.memory_space<smem>>
    %c0_i32_13 = arith.constant 0 : i32
    %26 = arith.cmpi sge, %25, %c0_i32_13 : i32
    %c64_i32_14 = arith.constant 64 : i32
    %27 = arith.cmpi slt, %25, %c64_i32_14 : i32
    %28 = arith.andi %26, %27 : i1
    %c0_i32_15 = arith.constant 0 : i32
    %29 = arith.select %28, %25, %c0_i32_15 : i32
    %c2_i32_16 = arith.constant 2 : i32
    %c0_i32_17 = arith.constant 0 : i32
    %30 = tpu.memref_slice %arg3[%29, %c0_i32_17] : memref<64x32xf32, #tpu.memory_space<any>> -> memref<1x32xf32, #tpu.memory_space<any>>
    %c2_i32_18 = arith.constant 2 : i32
    %c0_i32_19 = arith.constant 0 : i32
    %31 = tpu.memref_slice %arg5[%c2_i32_18, %c0_i32_19] : memref<8x32xf32, #tpu.memory_space<vmem>> -> memref<1x32xf32, #tpu.memory_space<vmem>>
    %32 = tpu.memref_slice %arg6[%c2_i32_16] : memref<8x!tpu.dma_semaphore, #tpu.memory_space<semaphore_mem>> -> memref<1x!tpu.dma_semaphore, #tpu.memory_space<semaphore_mem>>
    %33 = tpu.memref_squeeze %32 : memref<1x!tpu.dma_semaphore, #tpu.memory_space<semaphore_mem>> -> memref<!tpu.dma_semaphore, #tpu.memory_space<semaphore_mem>>
    tpu.enqueue_dma source(%30 : memref<1x32xf32, #tpu.memory_space<any>>) target(%31 : memref<1x32xf32, #tpu.memory_space<vmem>>) target_semaphore(%33 : memref<!tpu.dma_semaphore, #tpu.memory_space<semaphore_mem>>)
    %c3_i32 = arith.constant 3 : i32
    %34 = arith.addi %0, %c3_i32 : i32
    %35 = arith.index_cast %34 : i32 to index
    %36 = memref.load %arg1[%35] : memref<16xi32, #tpu.memory_space<smem>>
    %c0_i32_20 = arith.constant 0 : i32
    %37 = arith.cmpi sge, %36, %c0_i32_20 : i32
    %c64_i32_21 = arith.constant 64 : i32
    %38 = arith.cmpi slt, %36, %c64_i32_21 : i32
    %39 = arith.andi %37, %38 : i1
    %c0_i32_22 = arith.constant 0 : i32
    %40 = arith.select %39, %36, %c0_i32_22 : i32
    %c3_i32_23 = arith.constant 3 : i32
    %c0_i32_24 = arith.constant 0 : i32
    %41 = tpu.memref_slice %arg3[%40, %c0_i32_24] : memref<64x32xf32, #tpu.memory_space<any>> -> memref<1x32xf32, #tpu.memory_space<any>>
    %c3_i32_25 = arith.constant 3 : i32
    %c0_i32_26 = arith.constant 0 : i32
    %42 = tpu.memref_slice %arg5[%c3_i32_25, %c0_i32_26] : memref<8x32xf32, #tpu.memory_space<vmem>> -> memref<1x32xf32, #tpu.memory_space<vmem>>
    %43 = tpu.memref_slice %arg6[%c3_i32_23] : memref<8x!tpu.dma_semaphore, #tpu.memory_space<semaphore_mem>> -> memref<1x!tpu.dma_semaphore, #tpu.memory_space<semaphore_mem>>
    %44 = tpu.memref_squeeze %43 : memref<1x!tpu.dma_semaphore, #tpu.memory_space<semaphore_mem>> -> memref<!tpu.dma_semaphore, #tpu.memory_space<semaphore_mem>>
    tpu.enqueue_dma source(%41 : memref<1x32xf32, #tpu.memory_space<any>>) target(%42 : memref<1x32xf32, #tpu.memory_space<vmem>>) target_semaphore(%44 : memref<!tpu.dma_semaphore, #tpu.memory_space<semaphore_mem>>)
    %c4_i32 = arith.constant 4 : i32
    %45 = arith.addi %0, %c4_i32 : i32
    %46 = arith.index_cast %45 : i32 to index
    %47 = memref.load %arg1[%46] : memref<16xi32, #tpu.memory_space<smem>>
    %c0_i32_27 = arith.constant 0 : i32
    %48 = arith.cmpi sge, %47, %c0_i32_27 : i32
    %c64_i32_28 = arith.constant 64 : i32
    %49 = arith.cmpi slt, %47, %c64_i32_28 : i32
    %50 = arith.andi %48, %49 : i1
    %c0_i32_29 = arith.constant 0 : i32
    %51 = arith.select %50, %47, %c0_i32_29 : i32
    %c4_i32_30 = arith.constant 4 : i32
    %c0_i32_31 = arith.constant 0 : i32
    %52 = tpu.memref_slice %arg3[%51, %c0_i32_31] : memref<64x32xf32, #tpu.memory_space<any>> -> memref<1x32xf32, #tpu.memory_space<any>>
    %c4_i32_32 = arith.constant 4 : i32
    %c0_i32_33 = arith.constant 0 : i32
    %53 = tpu.memref_slice %arg5[%c4_i32_32, %c0_i32_33] : memref<8x32xf32, #tpu.memory_space<vmem>> -> memref<1x32xf32, #tpu.memory_space<vmem>>
    %54 = tpu.memref_slice %arg6[%c4_i32_30] : memref<8x!tpu.dma_semaphore, #tpu.memory_space<semaphore_mem>> -> memref<1x!tpu.dma_semaphore, #tpu.memory_space<semaphore_mem>>
    %55 = tpu.memref_squeeze %54 : memref<1x!tpu.dma_semaphore, #tpu.memory_space<semaphore_mem>> -> memref<!tpu.dma_semaphore, #tpu.memory_space<semaphore_mem>>
    tpu.enqueue_dma source(%52 : memref<1x32xf32, #tpu.memory_space<any>>) target(%53 : memref<1x32xf32, #tpu.memory_space<vmem>>) target_semaphore(%55 : memref<!tpu.dma_semaphore, #tpu.memory_space<semaphore_mem>>)
    %c5_i32 = arith.constant 5 : i32
    %56 = arith.addi %0, %c5_i32 : i32
    %57 = arith.index_cast %56 : i32 to index
    %58 = memref.load %arg1[%57] : memref<16xi32, #tpu.memory_space<smem>>
    %c0_i32_34 = arith.constant 0 : i32
    %59 = arith.cmpi sge, %58, %c0_i32_34 : i32
    %c64_i32_35 = arith.constant 64 : i32
    %60 = arith.cmpi slt, %58, %c64_i32_35 : i32
    %61 = arith.andi %59, %60 : i1
    %c0_i32_36 = arith.constant 0 : i32
    %62 = arith.select %61, %58, %c0_i32_36 : i32
    %c5_i32_37 = arith.constant 5 : i32
    %c0_i32_38 = arith.constant 0 : i32
    %63 = tpu.memref_slice %arg3[%62, %c0_i32_38] : memref<64x32xf32, #tpu.memory_space<any>> -> memref<1x32xf32, #tpu.memory_space<any>>
    %c5_i32_39 = arith.constant 5 : i32
    %c0_i32_40 = arith.constant 0 : i32
    %64 = tpu.memref_slice %arg5[%c5_i32_39, %c0_i32_40] : memref<8x32xf32, #tpu.memory_space<vmem>> -> memref<1x32xf32, #tpu.memory_space<vmem>>
    %65 = tpu.memref_slice %arg6[%c5_i32_37] : memref<8x!tpu.dma_semaphore, #tpu.memory_space<semaphore_mem>> -> memref<1x!tpu.dma_semaphore, #tpu.memory_space<semaphore_mem>>
    %66 = tpu.memref_squeeze %65 : memref<1x!tpu.dma_semaphore, #tpu.memory_space<semaphore_mem>> -> memref<!tpu.dma_semaphore, #tpu.memory_space<semaphore_mem>>
    tpu.enqueue_dma source(%63 : memref<1x32xf32, #tpu.memory_space<any>>) target(%64 : memref<1x32xf32, #tpu.memory_space<vmem>>) target_semaphore(%66 : memref<!tpu.dma_semaphore, #tpu.memory_space<semaphore_mem>>)
    %c6_i32 = arith.constant 6 : i32
    %67 = arith.addi %0, %c6_i32 : i32
    %68 = arith.index_cast %67 : i32 to index
    %69 = memref.load %arg1[%68] : memref<16xi32, #tpu.memory_space<smem>>
    %c0_i32_41 = arith.constant 0 : i32
    %70 = arith.cmpi sge, %69, %c0_i32_41 : i32
    %c64_i32_42 = arith.constant 64 : i32
    %71 = arith.cmpi slt, %69, %c64_i32_42 : i32
    %72 = arith.andi %70, %71 : i1
    %c0_i32_43 = arith.constant 0 : i32
    %73 = arith.select %72, %69, %c0_i32_43 : i32
    %c6_i32_44 = arith.constant 6 : i32
    %c0_i32_45 = arith.constant 0 : i32
    %74 = tpu.memref_slice %arg3[%73, %c0_i32_45] : memref<64x32xf32, #tpu.memory_space<any>> -> memref<1x32xf32, #tpu.memory_space<any>>
    %c6_i32_46 = arith.constant 6 : i32
    %c0_i32_47 = arith.constant 0 : i32
    %75 = tpu.memref_slice %arg5[%c6_i32_46, %c0_i32_47] : memref<8x32xf32, #tpu.memory_space<vmem>> -> memref<1x32xf32, #tpu.memory_space<vmem>>
    %76 = tpu.memref_slice %arg6[%c6_i32_44] : memref<8x!tpu.dma_semaphore, #tpu.memory_space<semaphore_mem>> -> memref<1x!tpu.dma_semaphore, #tpu.memory_space<semaphore_mem>>
    %77 = tpu.memref_squeeze %76 : memref<1x!tpu.dma_semaphore, #tpu.memory_space<semaphore_mem>> -> memref<!tpu.dma_semaphore, #tpu.memory_space<semaphore_mem>>
    tpu.enqueue_dma source(%74 : memref<1x32xf32, #tpu.memory_space<any>>) target(%75 : memref<1x32xf32, #tpu.memory_space<vmem>>) target_semaphore(%77 : memref<!tpu.dma_semaphore, #tpu.memory_space<semaphore_mem>>)
    %c7_i32 = arith.constant 7 : i32
    %78 = arith.addi %0, %c7_i32 : i32
    %79 = arith.index_cast %78 : i32 to index
    %80 = memref.load %arg1[%79] : memref<16xi32, #tpu.memory_space<smem>>
    %c0_i32_48 = arith.constant 0 : i32
    %81 = arith.cmpi sge, %80, %c0_i32_48 : i32
    %c64_i32_49 = arith.constant 64 : i32
    %82 = arith.cmpi slt, %80, %c64_i32_49 : i32
    %83 = arith.andi %81, %82 : i1
    %c0_i32_50 = arith.constant 0 : i32
    %84 = arith.select %83, %80, %c0_i32_50 : i32
    %c7_i32_51 = arith.constant 7 : i32
    %c0_i32_52 = arith.constant 0 : i32
    %85 = tpu.memref_slice %arg3[%84, %c0_i32_52] : memref<64x32xf32, #tpu.memory_space<any>> -> memref<1x32xf32, #tpu.memory_space<any>>
    %c7_i32_53 = arith.constant 7 : i32
    %c0_i32_54 = arith.constant 0 : i32
    %86 = tpu.memref_slice %arg5[%c7_i32_53, %c0_i32_54] : memref<8x32xf32, #tpu.memory_space<vmem>> -> memref<1x32xf32, #tpu.memory_space<vmem>>
    %87 = tpu.memref_slice %arg6[%c7_i32_51] : memref<8x!tpu.dma_semaphore, #tpu.memory_space<semaphore_mem>> -> memref<1x!tpu.dma_semaphore, #tpu.memory_space<semaphore_mem>>
    %88 = tpu.memref_squeeze %87 : memref<1x!tpu.dma_semaphore, #tpu.memory_space<semaphore_mem>> -> memref<!tpu.dma_semaphore, #tpu.memory_space<semaphore_mem>>
    tpu.enqueue_dma source(%85 : memref<1x32xf32, #tpu.memory_space<any>>) target(%86 : memref<1x32xf32, #tpu.memory_space<vmem>>) target_semaphore(%88 : memref<!tpu.dma_semaphore, #tpu.memory_space<semaphore_mem>>)
    %c0_i32_55 = arith.constant 0 : i32
    %c0_i32_56 = arith.constant 0 : i32
    %c0_i32_57 = arith.constant 0 : i32
    %89 = tpu.memref_slice %arg3[%c0_i32_56, %c0_i32_57] : memref<64x32xf32, #tpu.memory_space<any>> -> memref<1x32xf32, #tpu.memory_space<any>>
    %c0_i32_58 = arith.constant 0 : i32
    %c0_i32_59 = arith.constant 0 : i32
    %90 = tpu.memref_slice %arg5[%c0_i32_58, %c0_i32_59] : memref<8x32xf32, #tpu.memory_space<vmem>> -> memref<1x32xf32, #tpu.memory_space<vmem>>
    %91 = tpu.memref_slice %arg6[%c0_i32_55] : memref<8x!tpu.dma_semaphore, #tpu.memory_space<semaphore_mem>> -> memref<1x!tpu.dma_semaphore, #tpu.memory_space<semaphore_mem>>
    %92 = tpu.memref_squeeze %91 : memref<1x!tpu.dma_semaphore, #tpu.memory_space<semaphore_mem>> -> memref<!tpu.dma_semaphore, #tpu.memory_space<semaphore_mem>>
    tpu.wait_dma2 semaphore(%92 : memref<!tpu.dma_semaphore, #tpu.memory_space<semaphore_mem>>) src(%89 : memref<1x32xf32, #tpu.memory_space<any>>) dst(%90 : memref<1x32xf32, #tpu.memory_space<vmem>>)
    %c1_i32_60 = arith.constant 1 : i32
    %c0_i32_61 = arith.constant 0 : i32
    %c0_i32_62 = arith.constant 0 : i32
    %93 = tpu.memref_slice %arg3[%c0_i32_61, %c0_i32_62] : memref<64x32xf32, #tpu.memory_space<any>> -> memref<1x32xf32, #tpu.memory_space<any>>
    %c1_i32_63 = arith.constant 1 : i32
    %c0_i32_64 = arith.constant 0 : i32
    %94 = tpu.memref_slice %arg5[%c1_i32_63, %c0_i32_64] : memref<8x32xf32, #tpu.memory_space<vmem>> -> memref<1x32xf32, #tpu.memory_space<vmem>>
    %95 = tpu.memref_slice %arg6[%c1_i32_60] : memref<8x!tpu.dma_semaphore, #tpu.memory_space<semaphore_mem>> -> memref<1x!tpu.dma_semaphore, #tpu.memory_space<semaphore_mem>>
    %96 = tpu.memref_squeeze %95 : memref<1x!tpu.dma_semaphore, #tpu.memory_space<semaphore_mem>> -> memref<!tpu.dma_semaphore, #tpu.memory_space<semaphore_mem>>
    tpu.wait_dma2 semaphore(%96 : memref<!tpu.dma_semaphore, #tpu.memory_space<semaphore_mem>>) src(%93 : memref<1x32xf32, #tpu.memory_space<any>>) dst(%94 : memref<1x32xf32, #tpu.memory_space<vmem>>)
    %c2_i32_65 = arith.constant 2 : i32
    %c0_i32_66 = arith.constant 0 : i32
    %c0_i32_67 = arith.constant 0 : i32
    %97 = tpu.memref_slice %arg3[%c0_i32_66, %c0_i32_67] : memref<64x32xf32, #tpu.memory_space<any>> -> memref<1x32xf32, #tpu.memory_space<any>>
    %c2_i32_68 = arith.constant 2 : i32
    %c0_i32_69 = arith.constant 0 : i32
    %98 = tpu.memref_slice %arg5[%c2_i32_68, %c0_i32_69] : memref<8x32xf32, #tpu.memory_space<vmem>> -> memref<1x32xf32, #tpu.memory_space<vmem>>
    %99 = tpu.memref_slice %arg6[%c2_i32_65] : memref<8x!tpu.dma_semaphore, #tpu.memory_space<semaphore_mem>> -> memref<1x!tpu.dma_semaphore, #tpu.memory_space<semaphore_mem>>
    %100 = tpu.memref_squeeze %99 : memref<1x!tpu.dma_semaphore, #tpu.memory_space<semaphore_mem>> -> memref<!tpu.dma_semaphore, #tpu.memory_space<semaphore_mem>>
    tpu.wait_dma2 semaphore(%100 : memref<!tpu.dma_semaphore, #tpu.memory_space<semaphore_mem>>) src(%97 : memref<1x32xf32, #tpu.memory_space<any>>) dst(%98 : memref<1x32xf32, #tpu.memory_space<vmem>>)
    %c3_i32_70 = arith.constant 3 : i32
    %c0_i32_71 = arith.constant 0 : i32
    %c0_i32_72 = arith.constant 0 : i32
    %101 = tpu.memref_slice %arg3[%c0_i32_71, %c0_i32_72] : memref<64x32xf32, #tpu.memory_space<any>> -> memref<1x32xf32, #tpu.memory_space<any>>
    %c3_i32_73 = arith.constant 3 : i32
    %c0_i32_74 = arith.constant 0 : i32
    %102 = tpu.memref_slice %arg5[%c3_i32_73, %c0_i32_74] : memref<8x32xf32, #tpu.memory_space<vmem>> -> memref<1x32xf32, #tpu.memory_space<vmem>>
    %103 = tpu.memref_slice %arg6[%c3_i32_70] : memref<8x!tpu.dma_semaphore, #tpu.memory_space<semaphore_mem>> -> memref<1x!tpu.dma_semaphore, #tpu.memory_space<semaphore_mem>>
    %104 = tpu.memref_squeeze %103 : memref<1x!tpu.dma_semaphore, #tpu.memory_space<semaphore_mem>> -> memref<!tpu.dma_semaphore, #tpu.memory_space<semaphore_mem>>
    tpu.wait_dma2 semaphore(%104 : memref<!tpu.dma_semaphore, #tpu.memory_space<semaphore_mem>>) src(%101 : memref<1x32xf32, #tpu.memory_space<any>>) dst(%102 : memref<1x32xf32, #tpu.memory_space<vmem>>)
    %c4_i32_75 = arith.constant 4 : i32
    %c0_i32_76 = arith.constant 0 : i32
    %c0_i32_77 = arith.constant 0 : i32
    %105 = tpu.memref_slice %arg3[%c0_i32_76, %c0_i32_77] : memref<64x32xf32, #tpu.memory_space<any>> -> memref<1x32xf32, #tpu.memory_space<any>>
    %c4_i32_78 = arith.constant 4 : i32
    %c0_i32_79 = arith.constant 0 : i32
    %106 = tpu.memref_slice %arg5[%c4_i32_78, %c0_i32_79] : memref<8x32xf32, #tpu.memory_space<vmem>> -> memref<1x32xf32, #tpu.memory_space<vmem>>
    %107 = tpu.memref_slice %arg6[%c4_i32_75] : memref<8x!tpu.dma_semaphore, #tpu.memory_space<semaphore_mem>> -> memref<1x!tpu.dma_semaphore, #tpu.memory_space<semaphore_mem>>
    %108 = tpu.memref_squeeze %107 : memref<1x!tpu.dma_semaphore, #tpu.memory_space<semaphore_mem>> -> memref<!tpu.dma_semaphore, #tpu.memory_space<semaphore_mem>>
    tpu.wait_dma2 semaphore(%108 : memref<!tpu.dma_semaphore, #tpu.memory_space<semaphore_mem>>) src(%105 : memref<1x32xf32, #tpu.memory_space<any>>) dst(%106 : memref<1x32xf32, #tpu.memory_space<vmem>>)
    %c5_i32_80 = arith.constant 5 : i32
    %c0_i32_81 = arith.constant 0 : i32
    %c0_i32_82 = arith.constant 0 : i32
    %109 = tpu.memref_slice %arg3[%c0_i32_81, %c0_i32_82] : memref<64x32xf32, #tpu.memory_space<any>> -> memref<1x32xf32, #tpu.memory_space<any>>
    %c5_i32_83 = arith.constant 5 : i32
    %c0_i32_84 = arith.constant 0 : i32
    %110 = tpu.memref_slice %arg5[%c5_i32_83, %c0_i32_84] : memref<8x32xf32, #tpu.memory_space<vmem>> -> memref<1x32xf32, #tpu.memory_space<vmem>>
    %111 = tpu.memref_slice %arg6[%c5_i32_80] : memref<8x!tpu.dma_semaphore, #tpu.memory_space<semaphore_mem>> -> memref<1x!tpu.dma_semaphore, #tpu.memory_space<semaphore_mem>>
    %112 = tpu.memref_squeeze %111 : memref<1x!tpu.dma_semaphore, #tpu.memory_space<semaphore_mem>> -> memref<!tpu.dma_semaphore, #tpu.memory_space<semaphore_mem>>
    tpu.wait_dma2 semaphore(%112 : memref<!tpu.dma_semaphore, #tpu.memory_space<semaphore_mem>>) src(%109 : memref<1x32xf32, #tpu.memory_space<any>>) dst(%110 : memref<1x32xf32, #tpu.memory_space<vmem>>)
    %c6_i32_85 = arith.constant 6 : i32
    %c0_i32_86 = arith.constant 0 : i32
    %c0_i32_87 = arith.constant 0 : i32
    %113 = tpu.memref_slice %arg3[%c0_i32_86, %c0_i32_87] : memref<64x32xf32, #tpu.memory_space<any>> -> memref<1x32xf32, #tpu.memory_space<any>>
    %c6_i32_88 = arith.constant 6 : i32
    %c0_i32_89 = arith.constant 0 : i32
    %114 = tpu.memref_slice %arg5[%c6_i32_88, %c0_i32_89] : memref<8x32xf32, #tpu.memory_space<vmem>> -> memref<1x32xf32, #tpu.memory_space<vmem>>
    %115 = tpu.memref_slice %arg6[%c6_i32_85] : memref<8x!tpu.dma_semaphore, #tpu.memory_space<semaphore_mem>> -> memref<1x!tpu.dma_semaphore, #tpu.memory_space<semaphore_mem>>
    %116 = tpu.memref_squeeze %115 : memref<1x!tpu.dma_semaphore, #tpu.memory_space<semaphore_mem>> -> memref<!tpu.dma_semaphore, #tpu.memory_space<semaphore_mem>>
    tpu.wait_dma2 semaphore(%116 : memref<!tpu.dma_semaphore, #tpu.memory_space<semaphore_mem>>) src(%113 : memref<1x32xf32, #tpu.memory_space<any>>) dst(%114 : memref<1x32xf32, #tpu.memory_space<vmem>>)
    %c7_i32_90 = arith.constant 7 : i32
    %c0_i32_91 = arith.constant 0 : i32
    %c0_i32_92 = arith.constant 0 : i32
    %117 = tpu.memref_slice %arg3[%c0_i32_91, %c0_i32_92] : memref<64x32xf32, #tpu.memory_space<any>> -> memref<1x32xf32, #tpu.memory_space<any>>
    %c7_i32_93 = arith.constant 7 : i32
    %c0_i32_94 = arith.constant 0 : i32
    %118 = tpu.memref_slice %arg5[%c7_i32_93, %c0_i32_94] : memref<8x32xf32, #tpu.memory_space<vmem>> -> memref<1x32xf32, #tpu.memory_space<vmem>>
    %119 = tpu.memref_slice %arg6[%c7_i32_90] : memref<8x!tpu.dma_semaphore, #tpu.memory_space<semaphore_mem>> -> memref<1x!tpu.dma_semaphore, #tpu.memory_space<semaphore_mem>>
    %120 = tpu.memref_squeeze %119 : memref<1x!tpu.dma_semaphore, #tpu.memory_space<semaphore_mem>> -> memref<!tpu.dma_semaphore, #tpu.memory_space<semaphore_mem>>
    tpu.wait_dma2 semaphore(%120 : memref<!tpu.dma_semaphore, #tpu.memory_space<semaphore_mem>>) src(%117 : memref<1x32xf32, #tpu.memory_space<any>>) dst(%118 : memref<1x32xf32, #tpu.memory_space<vmem>>)
    %c0 = arith.constant 0 : index
    %c0_95 = arith.constant 0 : index
    %121 = vector.load %arg2[%c0, %c0_95] : memref<8x1xi32, #tpu.memory_space<vmem>>, vector<8x1xi32>
    %c0_i32_96 = arith.constant 0 : i32
    %122 = vector.broadcast %c0_i32_96 : i32 to vector<8x1xi32>
    %123 = arith.cmpi sge, %121, %122 : vector<8x1xi32>
    %c64_i32_97 = arith.constant 64 : i32
    %124 = vector.broadcast %c64_i32_97 : i32 to vector<8x1xi32>
    %125 = arith.cmpi slt, %121, %124 : vector<8x1xi32>
    %126 = arith.andi %123, %125 : vector<8x1xi1>
    %c0_98 = arith.constant 0 : index
    %c0_99 = arith.constant 0 : index
    %127 = vector.load %arg5[%c0_98, %c0_99] : memref<8x32xf32, #tpu.memory_space<vmem>>, vector<8x32xf32>
    %cst = arith.constant 0.000000e+00 : f32
    %128 = vector.broadcast %cst : f32 to vector<8x32xf32>
    %129 = vector.shape_cast %126 : vector<8x1xi1> to vector<8x1xi1>
    %130 = vector.broadcast %129 : vector<8x1xi1> to vector<8x32xi1>
    %131 = arith.select %130, %127, %128 : vector<8x32xi1>, vector<8x32xf32>
    %c0_100 = arith.constant 0 : index
    %c0_101 = arith.constant 0 : index
    %132 = vector.load %arg4[%c0_100, %c0_101] : memref<8x32xf32, #tpu.memory_space<vmem>>, vector<8x32xf32>
    tpu.vector_store %arg4[%c0_100, %c0_101], %131 {strides = array<i32>} : memref<8x32xf32, #tpu.memory_space<vmem>>, vector<8x32xf32>,
    return
  }
  func.func @transform_0(%arg0: i32, %arg1: memref<16xi32, #tpu.memory_space<smem>>) -> (i32, i32) {
    %c0_i32 = arith.constant 0 : i32
    %c0_i32_0 = arith.constant 0 : i32
    return %arg0, %c0_i32 : i32, i32
  }
  func.func @transform_2(%arg0: i32, %arg1: memref<16xi32, #tpu.memory_space<smem>>) -> (i32, i32) {
    %c0_i32 = arith.constant 0 : i32
    %c0_i32_0 = arith.constant 0 : i32
    return %arg0, %c0_i32 : i32, i32
  }
}

</mosaic_0001>

<llo_original>
// kernel: tpu_custom_call.1
$region0: #{tpu_custom_call.1}
  #allocation0 [shape = 'u32[]', space=smem, size = 0x4, offset = 0x4, fixed_abs, tag = 'smem constant byte address 0x4 - core index']
  #allocation1 [shape = 'u32[72,128]{1,0:T(1,128)}', space=vmem, size = 0x9000, scoped, tag = 'internal scratch']
  #allocation2 [shape = 'f32[8,32]{1,0:T(8,128)}', space=vmem, size = 0x1000, scoped, tag = 'scratch operand']
  #allocation3 [shape = 's32[8]{0}', space=sflag, size = 0x20, scoped, tag = 'scratch operand']
  #allocation4 [shape = 's32[1]{0}', space=sflag, size = 0x4, scoped, tag = 'scoped memory for tpu_custom_call.1']
  #allocation5 [shape = 'u8[512]{0}', space=smem, size = 0x200, scoped, tag = 'prefetched SMEM operand 0']
  #allocation8 [shape = 's32[]', space=sflag, size = 0x4, offset = 0, fixed_abs, tag = 'sflag constant byte address 0x0 - dummy sync flag']
  #allocation9 [shape = 's32[]', space=sflag, size = 0x4, offset = 0, fixed_abs, tag = 'sflag constant byte address 0x0 - dummy sync flag']
  #allocation10 [shape = 's32[]', space=sflag, size = 0x4, offset = 0, fixed_abs, tag = 'sflag constant byte address 0x0 - dummy sync flag']
  #allocation11 [shape = 's32[]', space=sflag, size = 0x4, offset = 0, fixed_abs, tag = 'sflag constant byte address 0x0 - dummy sync flag']
  #allocation12 [shape = 's32[]', space=sflag, size = 0x4, offset = 0, fixed_abs, tag = 'sflag constant byte address 0x0 - dummy sync flag']
  #allocation13 [shape = 's32[]', space=sflag, size = 0x4, offset = 0, fixed_abs, tag = 'sflag constant byte address 0x0 - dummy sync flag']
  #allocation14 [shape = 's32[]', space=sflag, size = 0x4, offset = 0, fixed_abs, tag = 'sflag constant byte address 0x0 - dummy sync flag']
  #allocation15 [shape = 's32[]', space=sflag, size = 0x4, offset = 0, fixed_abs, tag = 'sflag constant byte address 0x0 - dummy sync flag']
  %s0 = inlined_call_operand.vmem [shape: s32[16], index: 0, kind: input, shape index: {}]
  %s1 = inlined_call_operand.vmem [shape: s32[16,1], index: 1, kind: input, shape index: {}]
  %s2 = inlined_call_operand.vmem [shape: f32[64,32], index: 2, kind: input, shape index: {}]
  %s3 = inlined_call_operand.hbm [shape: f32[16,32], index: 3, kind: output, shape index: {}]
  %s4 = sld [smem:[#allocation0]]
  $region277: #{tpu_custom_call.1} parent=0
    _
  %s6 = ssub.s32 1, %s4
  %s7 = scalar_select 0, %s6, %s4
  %s9 = sshll.u32 %s0, 4
  %s10 = int_to_ptr.vmem [resolvable:$true] %s9
  %12 = dma.vmem_to_smem %s10, 16, [#allocation5], [#allocation4]
  %14 = dma.done [#allocation4], 16
  %15 = sfence
  $region1: #{tpu_custom_call.1} parent=0
    #allocation6 [shape = 'u8[8192]{0}', space=vmem, size = 0x2000, scoped, tag = 'output window, operand 0']
    #allocation7 [shape = 's32[2]{0}', space=sflag, size = 0x8, scoped, tag = 'scoped memory for tpu_custom_call.1']
    %16 = vsyncpa [#allocation7], 0
    %s17 = scalar_lea.sflag [#allocation7], 1
    %18 = vsyncpa %s17, 0
    loop: start=0, step=1, limit=4
    $region2: #{tpu_custom_call.1} parent=1 // loop_pre_header
      _
    $region3: #{tpu_custom_call.1} parent=1 // loop_header
      %s20 = sphi 0, %s24
      %p21 = scmp.ge.s32.totalorder %s20, 4
      %s30 = sphi 0, %s32
      %s33 = sphi 0, %s30
      %s34 = sphi 0, %s33
      %s50 = sphi 0, %s34
      %s56 = sphi 0, %s58
      %s59 = sphi 0, %s56
      %s60 = sphi 0, %s59
      %s76 = sphi 0, %s60
    $region4: #{tpu_custom_call.1} parent=1 // loop_header_branch
      %23 = sbr.rel (%p21) target = $region8
    $region5: #{tpu_custom_call.1} parent=1 // loop_body
      %s25 = ssub.s32 %s20, 1
      %s26 = ssub.s32 %s20, 2
      %s27 = sadd.s32 %s20, 1
      %s28 = ssub.s32 %s20, %s27
      %p29 = scmp.eq.s32.totalorder %s28, 0
      %s31 = sadd.s32 %s30, 1
      %s32 = scalar_select %p29, %s30, %s31
      %p35 = pneg %p29
      %p36 = scmp.eq.s32.totalorder %s20, 1
      %p37 = por %p35, %p36
      %p38 = scmp.ne.s32.totalorder %s30, %s33
      %p39 = scmp.eq.s32.totalorder %s20, 0
      %p40 = por %p38, %p39
      %p41 = scmp.ne.s32.totalorder %s30, %s33
      %p42 = scmp.eq.s32.totalorder %s25, 1
      %p43 = por %p41, %p42
      %p44 = scmp.ne.s32.totalorder %s33, %s34
      %p45 = scmp.eq.s32.totalorder %s25, 0
      %p46 = por %p44, %p45
      %p47 = scmp.ne.s32.totalorder %s33, %s34
      %p48 = scmp.eq.s32.totalorder %s26, 1
      %p49 = por %p47, %p48
      %p51 = scmp.ne.s32.totalorder %s34, %s50
      %p52 = scmp.eq.s32.totalorder %s26, 0
      %p53 = por %p51, %p52
      %s54 = ssub.s32 %s20, %s27
      %p55 = scmp.eq.s32.totalorder %s54, 0
      %s57 = sadd.s32 %s56, 1
      %s58 = scalar_select %p55, %s56, %s57
      %p61 = pneg %p55
      %p62 = scmp.eq.s32.totalorder %s20, 1
      %p63 = por %p61, %p62
      %p64 = scmp.ne.s32.totalorder %s56, %s59
      %p65 = scmp.eq.s32.totalorder %s20, 0
      %p66 = por %p64, %p65
      %p67 = scmp.ne.s32.totalorder %s56, %s59
      %p68 = scmp.eq.s32.totalorder %s25, 1
      %p69 = por %p67, %p68
      %p70 = scmp.ne.s32.totalorder %s59, %s60
      %p71 = scmp.eq.s32.totalorder %s25, 0
      %p72 = por %p70, %p71
      %p73 = scmp.ne.s32.totalorder %s59, %s60
      %p74 = scmp.eq.s32.totalorder %s26, 1
      %p75 = por %p73, %p74
      %p77 = scmp.ne.s32.totalorder %s60, %s76
      %p78 = scmp.eq.s32.totalorder %s26, 0
      %p79 = por %p77, %p78
      %p80 = scmp.le.s32.totalorder 1, %s20
      %p81 = scmp.lt.s32.totalorder %s20, 3
      %p82 = pnand %p80, %p81
      %p83 = pneg %p82
      // Predicated region
      $region9: #{tpu_custom_call.1} parent=5 // pred_check
        _
      $region10: #{tpu_custom_call.1} parent=5 // pred_check_branch
        %85 = sbr.rel (%p82) target = $region12
      $region11: #{tpu_custom_call.1} parent=5 // pred_region
        %s86 = ssub.s32 %s20, 1
      $region12: #{tpu_custom_call.1} parent=5 // pred_fallthru
        _
      %p87 = scmp.lt.s32.totalorder %s20, 2
      // Predicated region
      $region13: #{tpu_custom_call.1} parent=5 // pred_check
        %p88 = pneg %p87
      $region14: #{tpu_custom_call.1} parent=5 // pred_check_branch
        %90 = sbr.rel (%p88) target = $region16
      $region15: #{tpu_custom_call.1} parent=5 // pred_region
        // Predicated region
        $region17: #{tpu_custom_call.1} parent=15 // pred_check
          %p91 = pneg %p40
        $region18: #{tpu_custom_call.1} parent=15 // pred_check_branch
          %93 = sbr.rel (%p91) target = $region20
        $region19: #{tpu_custom_call.1} parent=15 // pred_region
          %p94 = scmp.lt.s32.totalorder %s20, 1
          %s95 = scalar_select %p94, %s20, 1
          %s96 = smul.addr %s95, 8
          %s97 = scalar_lea.vmem %s1, %s96
        $region20: #{tpu_custom_call.1} parent=15 // pred_fallthru
          _
      $region16: #{tpu_custom_call.1} parent=5 // pred_fallthru
        _
      %p98 = scmp.le.s32.totalorder 1, %s20
      %p99 = scmp.lt.s32.totalorder %s20, 3
      %p100 = pnand %p98, %p99
      %p101 = pneg %p100
      // Predicated region
      $region21: #{tpu_custom_call.1} parent=5 // pred_check
        _
      $region22: #{tpu_custom_call.1} parent=5 // pred_check_branch
        %103 = sbr.rel (%p100) target = $region24
      $region23: #{tpu_custom_call.1} parent=5 // pred_region
        %s104 = ssub.s32 %s20, 1
        %p105 = scmp.lt.s32.totalorder %s25, 1
        %s106 = scalar_select %p105, %s25, 1
        %s107 = smul.addr %s106, 8
        %s108 = scalar_lea.vmem %s1, %s107
        %p109 = pneg %p46
        %p110 = pneg %p43
        %p111 = pneg %p72
        %p112 = pneg %p69
        %s113 = sand.u32 %s59, 1
        %s114 = scalar_lea.sflag [#allocation7], %s113
        %s115 = sand.u32 %s59, 1
        %s116 = smul.addr %s115, 8
        %s117 = scalar_lea.vmem [#allocation6], %s116
        %p118 = scmp.lt.s32.totalorder %s25, 1
        %s119 = scalar_select %p118, %s25, 1
        %s120 = smul.addr %s119, 8
        %s121 = scalar_lea.vmem %s1, %s120
        %s122 = smul.u32 %s25, 8
        %s123 = sld [smem:[#allocation5 + %s122]]
        %p124 = scmp.ge.s32.totalorder %s123, 0
        %p125 = scmp.lt.s32.totalorder %s123, 64
        %p126 = pnand %p124, %p125
        %p127 = pneg %p126
        %s128 = scalar_select %p127, %s123, 0
        %s129 = scalar_lea.vmem %s2, %s128
        // Predicated region
        $region25: #{tpu_custom_call.1} parent=23 // pred_check
          _
        $region26: #{tpu_custom_call.1} parent=23 // pred_check_branch
          %131 = sbr.rel target = $region28
        $region27: #{tpu_custom_call.1} parent=23 // pred_region
          // Predicated region
          $region40: #{tpu_custom_call.1} parent=27 // pred_check
            _
          $region41: #{tpu_custom_call.1} parent=27 // pred_check_branch
            %147 = sbr.rel (0) target = $region43
          $region42: #{tpu_custom_call.1} parent=27 // pred_region
            %s149 = ssub.s32 2, 1
            loop: start=0, step=1, limit=1
            $region44: #{tpu_custom_call.1} parent=42 // loop_pre_header
              _
            $region45: #{tpu_custom_call.1} parent=42 // loop_header
              %s151 = sphi 0, %s155
              %p152 = scmp.ge.s32.totalorder %s151, 1
              %s156 = sphi %s129, %s129
              %s157 = sphi [#allocation2], [#allocation2]
            $region46: #{tpu_custom_call.1} parent=42 // loop_header_branch
              %154 = sbr.rel (%p152) target = $region50
            $region47: #{tpu_custom_call.1} parent=42 // loop_body
              %v158 = vld [vmem:[%s156] sm:%s149]
              %159 = vst [vmem:[%s157] sm:%s149] %v158
            $region48: #{tpu_custom_call.1} parent=42 // loop_footer
              %s155 = sadd.s32 1, %s151
            $region49: #{tpu_custom_call.1} parent=42 // loop_footer_branch
              %150 = sbr.rel target = $region45
            $region50: #{tpu_custom_call.1} parent=42 // loop_exit
              _
          $region43: #{tpu_custom_call.1} parent=27 // pred_fallthru
            _
        $region28: #{tpu_custom_call.1} parent=23 // pred_fallthru
          _
        // Predicated region
        $region29: #{tpu_custom_call.1} parent=23 // pred_check
          _
        $region30: #{tpu_custom_call.1} parent=23 // pred_check_branch
          %133 = sbr.rel (0) target = $region32
        $region31: #{tpu_custom_call.1} parent=23 // pred_region
          %s135 = ssub.s32 2, 1
          loop: start=0, step=1, limit=1
          $region33: #{tpu_custom_call.1} parent=31 // loop_pre_header
            _
          $region34: #{tpu_custom_call.1} parent=31 // loop_header
            %s137 = sphi 0, %s141
            %p138 = scmp.ge.s32.totalorder %s137, 1
            %s142 = sphi %s129, %s129
            %s143 = sphi [#allocation2], [#allocation2]
          $region35: #{tpu_custom_call.1} parent=31 // loop_header_branch
            %140 = sbr.rel (%p138) target = $region39
          $region36: #{tpu_custom_call.1} parent=31 // loop_body
            %v144 = vld [vmem:[%s142] sm:%s135]
            %145 = vst [vmem:[%s143] sm:%s135] %v144
          $region37: #{tpu_custom_call.1} parent=31 // loop_footer
            %s141 = sadd.s32 1, %s137
          $region38: #{tpu_custom_call.1} parent=31 // loop_footer_branch
            %136 = sbr.rel target = $region34
          $region39: #{tpu_custom_call.1} parent=31 // loop_exit
            _
        $region32: #{tpu_custom_call.1} parent=23 // pred_fallthru
          _
        // Predicated region
        $region51: #{tpu_custom_call.1} parent=23 // pred_check
          _
        $region52: #{tpu_custom_call.1} parent=23 // pred_check_branch
          %162 = sbr.rel (0) target = $region54
        $region53: #{tpu_custom_call.1} parent=23 // pred_region
          %163 = vsyncadd [#allocation3], 16
        $region54: #{tpu_custom_call.1} parent=23 // pred_fallthru
          _
        %s164 = sadd.s32 %s122, 1
        %s165 = sld [smem:[#allocation5 + %s164]]
        %p166 = scmp.ge.s32.totalorder %s165, 0
        %p167 = scmp.lt.s32.totalorder %s165, 64
        %p168 = pnand %p166, %p167
        %p169 = pneg %p168
        %s170 = scalar_select %p169, %s165, 0
        %s171 = scalar_lea.vmem %s2, %s170
        %s172 = scalar_lea.vmem [#allocation2], 1
        %s173 = scalar_lea.sflag [#allocation3], 1
        // Predicated region
        $region55: #{tpu_custom_call.1} parent=23 // pred_check
          _
        $region56: #{tpu_custom_call.1} parent=23 // pred_check_branch
          %175 = sbr.rel target = $region58
        $region57: #{tpu_custom_call.1} parent=23 // pred_region
          // Predicated region
          $region70: #{tpu_custom_call.1} parent=57 // pred_check
            _
          $region71: #{tpu_custom_call.1} parent=57 // pred_check_branch
            %191 = sbr.rel (0) target = $region73
          $region72: #{tpu_custom_call.1} parent=57 // pred_region
            %s193 = ssub.s32 2, 1
            loop: start=0, step=1, limit=1
            $region74: #{tpu_custom_call.1} parent=72 // loop_pre_header
              _
            $region75: #{tpu_custom_call.1} parent=72 // loop_header
              %s195 = sphi 0, %s199
              %p196 = scmp.ge.s32.totalorder %s195, 1
              %s200 = sphi %s171, %s171
              %s201 = sphi %s172, %s172
            $region76: #{tpu_custom_call.1} parent=72 // loop_header_branch
              %198 = sbr.rel (%p196) target = $region80
            $region77: #{tpu_custom_call.1} parent=72 // loop_body
              %v202 = vld [vmem:[%s200] sm:%s193]
              %203 = vst [vmem:[%s201] sm:%s193] %v202
            $region78: #{tpu_custom_call.1} parent=72 // loop_footer
              %s199 = sadd.s32 1, %s195
            $region79: #{tpu_custom_call.1} parent=72 // loop_footer_branch
              %194 = sbr.rel target = $region75
            $region80: #{tpu_custom_call.1} parent=72 // loop_exit
              _
          $region73: #{tpu_custom_call.1} parent=57 // pred_fallthru
            _
        $region58: #{tpu_custom_call.1} parent=23 // pred_fallthru
          _
        // Predicated region
        $region59: #{tpu_custom_call.1} parent=23 // pred_check
          _
        $region60: #{tpu_custom_call.1} parent=23 // pred_check_branch
          %177 = sbr.rel (0) target = $region62
        $region61: #{tpu_custom_call.1} parent=23 // pred_region
          %s179 = ssub.s32 2, 1
          loop: start=0, step=1, limit=1
          $region63: #{tpu_custom_call.1} parent=61 // loop_pre_header
            _
          $region64: #{tpu_custom_call.1} parent=61 // loop_header
            %s181 = sphi 0, %s185
            %p182 = scmp.ge.s32.totalorder %s181, 1
            %s186 = sphi %s171, %s171
            %s187 = sphi %s172, %s172
          $region65: #{tpu_custom_call.1} parent=61 // loop_header_branch
            %184 = sbr.rel (%p182) target = $region69
          $region66: #{tpu_custom_call.1} parent=61 // loop_body
            %v188 = vld [vmem:[%s186] sm:%s179]
            %189 = vst [vmem:[%s187] sm:%s179] %v188
          $region67: #{tpu_custom_call.1} parent=61 // loop_footer
            %s185 = sadd.s32 1, %s181
          $region68: #{tpu_custom_call.1} parent=61 // loop_footer_branch
            %180 = sbr.rel target = $region64
          $region69: #{tpu_custom_call.1} parent=61 // loop_exit
            _
        $region62: #{tpu_custom_call.1} parent=23 // pred_fallthru
          _
        // Predicated region
        $region81: #{tpu_custom_call.1} parent=23 // pred_check
          _
        $region82: #{tpu_custom_call.1} parent=23 // pred_check_branch
          %206 = sbr.rel (0) target = $region84
        $region83: #{tpu_custom_call.1} parent=23 // pred_region
          %207 = vsyncadd %s173, 16
        $region84: #{tpu_custom_call.1} parent=23 // pred_fallthru
          _
        %s208 = sadd.s32 %s122, 2
        %s209 = sld [smem:[#allocation5 + %s208]]
        %p210 = scmp.ge.s32.totalorder %s209, 0
        %p211 = scmp.lt.s32.totalorder %s209, 64
        %p212 = pnand %p210, %p211
        %p213 = pneg %p212
        %s214 = scalar_select %p213, %s209, 0
        %s215 = scalar_lea.vmem %s2, %s214
        %s216 = scalar_lea.vmem [#allocation2], 2
        %s217 = scalar_lea.sflag [#allocation3], 2
        // Predicated region
        $region85: #{tpu_custom_call.1} parent=23 // pred_check
          _
        $region86: #{tpu_custom_call.1} parent=23 // pred_check_branch
          %219 = sbr.rel target = $region88
        $region87: #{tpu_custom_call.1} parent=23 // pred_region
          // Predicated region
          $region100: #{tpu_custom_call.1} parent=87 // pred_check
            _
          $region101: #{tpu_custom_call.1} parent=87 // pred_check_branch
            %235 = sbr.rel (0) target = $region103
          $region102: #{tpu_custom_call.1} parent=87 // pred_region
            %s237 = ssub.s32 2, 1
            loop: start=0, step=1, limit=1
            $region104: #{tpu_custom_call.1} parent=102 // loop_pre_header
              _
            $region105: #{tpu_custom_call.1} parent=102 // loop_header
              %s239 = sphi 0, %s243
              %p240 = scmp.ge.s32.totalorder %s239, 1
              %s244 = sphi %s215, %s215
              %s245 = sphi %s216, %s216
            $region106: #{tpu_custom_call.1} parent=102 // loop_header_branch
              %242 = sbr.rel (%p240) target = $region110
            $region107: #{tpu_custom_call.1} parent=102 // loop_body
              %v246 = vld [vmem:[%s244] sm:%s237]
              %247 = vst [vmem:[%s245] sm:%s237] %v246
            $region108: #{tpu_custom_call.1} parent=102 // loop_footer
              %s243 = sadd.s32 1, %s239
            $region109: #{tpu_custom_call.1} parent=102 // loop_footer_branch
              %238 = sbr.rel target = $region105
            $region110: #{tpu_custom_call.1} parent=102 // loop_exit
              _
          $region103: #{tpu_custom_call.1} parent=87 // pred_fallthru
            _
        $region88: #{tpu_custom_call.1} parent=23 // pred_fallthru
          _
        // Predicated region
        $region89: #{tpu_custom_call.1} parent=23 // pred_check
          _
        $region90: #{tpu_custom_call.1} parent=23 // pred_check_branch
          %221 = sbr.rel (0) target = $region92
        $region91: #{tpu_custom_call.1} parent=23 // pred_region
          %s223 = ssub.s32 2, 1
          loop: start=0, step=1, limit=1
          $region93: #{tpu_custom_call.1} parent=91 // loop_pre_header
            _
          $region94: #{tpu_custom_call.1} parent=91 // loop_header
            %s225 = sphi 0, %s229
            %p226 = scmp.ge.s32.totalorder %s225, 1
            %s230 = sphi %s215, %s215
            %s231 = sphi %s216, %s216
          $region95: #{tpu_custom_call.1} parent=91 // loop_header_branch
            %228 = sbr.rel (%p226) target = $region99
          $region96: #{tpu_custom_call.1} parent=91 // loop_body
            %v232 = vld [vmem:[%s230] sm:%s223]
            %233 = vst [vmem:[%s231] sm:%s223] %v232
          $region97: #{tpu_custom_call.1} parent=91 // loop_footer
            %s229 = sadd.s32 1, %s225
          $region98: #{tpu_custom_call.1} parent=91 // loop_footer_branch
            %224 = sbr.rel target = $region94
          $region99: #{tpu_custom_call.1} parent=91 // loop_exit
            _
        $region92: #{tpu_custom_call.1} parent=23 // pred_fallthru
          _
        // Predicated region
        $region111: #{tpu_custom_call.1} parent=23 // pred_check
          _
        $region112: #{tpu_custom_call.1} parent=23 // pred_check_branch
          %250 = sbr.rel (0) target = $region114
        $region113: #{tpu_custom_call.1} parent=23 // pred_region
          %251 = vsyncadd %s217, 16
        $region114: #{tpu_custom_call.1} parent=23 // pred_fallthru
          _
        %s252 = sadd.s32 %s122, 3
        %s253 = sld [smem:[#allocation5 + %s252]]
        %p254 = scmp.ge.s32.totalorder %s253, 0
        %p255 = scmp.lt.s32.totalorder %s253, 64
        %p256 = pnand %p254, %p255
        %p257 = pneg %p256
        %s258 = scalar_select %p257, %s253, 0
        %s259 = scalar_lea.vmem %s2, %s258
        %s260 = scalar_lea.vmem [#allocation2], 3
        %s261 = scalar_lea.sflag [#allocation3], 3
        // Predicated region
        $region115: #{tpu_custom_call.1} parent=23 // pred_check
          _
        $region116: #{tpu_custom_call.1} parent=23 // pred_check_branch
          %263 = sbr.rel target = $region118
        $region117: #{tpu_custom_call.1} parent=23 // pred_region
          // Predicated region
          $region130: #{tpu_custom_call.1} parent=117 // pred_check
            _
          $region131: #{tpu_custom_call.1} parent=117 // pred_check_branch
            %279 = sbr.rel (0) target = $region133
          $region132: #{tpu_custom_call.1} parent=117 // pred_region
            %s281 = ssub.s32 2, 1
            loop: start=0, step=1, limit=1
            $region134: #{tpu_custom_call.1} parent=132 // loop_pre_header
              _
            $region135: #{tpu_custom_call.1} parent=132 // loop_header
              %s283 = sphi 0, %s287
              %p284 = scmp.ge.s32.totalorder %s283, 1
              %s288 = sphi %s259, %s259
              %s289 = sphi %s260, %s260
            $region136: #{tpu_custom_call.1} parent=132 // loop_header_branch
              %286 = sbr.rel (%p284) target = $region140
            $region137: #{tpu_custom_call.1} parent=132 // loop_body
              %v290 = vld [vmem:[%s288] sm:%s281]
              %291 = vst [vmem:[%s289] sm:%s281] %v290
            $region138: #{tpu_custom_call.1} parent=132 // loop_footer
              %s287 = sadd.s32 1, %s283
            $region139: #{tpu_custom_call.1} parent=132 // loop_footer_branch
              %282 = sbr.rel target = $region135
            $region140: #{tpu_custom_call.1} parent=132 // loop_exit
              _
          $region133: #{tpu_custom_call.1} parent=117 // pred_fallthru
            _
        $region118: #{tpu_custom_call.1} parent=23 // pred_fallthru
          _
        // Predicated region
        $region119: #{tpu_custom_call.1} parent=23 // pred_check
          _
        $region120: #{tpu_custom_call.1} parent=23 // pred_check_branch
          %265 = sbr.rel (0) target = $region122
        $region121: #{tpu_custom_call.1} parent=23 // pred_region
          %s267 = ssub.s32 2, 1
          loop: start=0, step=1, limit=1
          $region123: #{tpu_custom_call.1} parent=121 // loop_pre_header
            _
          $region124: #{tpu_custom_call.1} parent=121 // loop_header
            %s269 = sphi 0, %s273
            %p270 = scmp.ge.s32.totalorder %s269, 1
            %s274 = sphi %s259, %s259
            %s275 = sphi %s260, %s260
          $region125: #{tpu_custom_call.1} parent=121 // loop_header_branch
            %272 = sbr.rel (%p270) target = $region129
          $region126: #{tpu_custom_call.1} parent=121 // loop_body
            %v276 = vld [vmem:[%s274] sm:%s267]
            %277 = vst [vmem:[%s275] sm:%s267] %v276
          $region127: #{tpu_custom_call.1} parent=121 // loop_footer
            %s273 = sadd.s32 1, %s269
          $region128: #{tpu_custom_call.1} parent=121 // loop_footer_branch
            %268 = sbr.rel target = $region124
          $region129: #{tpu_custom_call.1} parent=121 // loop_exit
            _
        $region122: #{tpu_custom_call.1} parent=23 // pred_fallthru
          _
        // Predicated region
        $region141: #{tpu_custom_call.1} parent=23 // pred_check
          _
        $region142: #{tpu_custom_call.1} parent=23 // pred_check_branch
          %294 = sbr.rel (0) target = $region144
        $region143: #{tpu_custom_call.1} parent=23 // pred_region
          %295 = vsyncadd %s261, 16
        $region144: #{tpu_custom_call.1} parent=23 // pred_fallthru
          _
        %s296 = sadd.s32 %s122, 4
        %s297 = sld [smem:[#allocation5 + %s296]]
        %p298 = scmp.ge.s32.totalorder %s297, 0
        %p299 = scmp.lt.s32.totalorder %s297, 64
        %p300 = pnand %p298, %p299
        %p301 = pneg %p300
        %s302 = scalar_select %p301, %s297, 0
        %s303 = scalar_lea.vmem %s2, %s302
        %s304 = scalar_lea.vmem [#allocation2], 4
        %s305 = scalar_lea.sflag [#allocation3], 4
        // Predicated region
        $region145: #{tpu_custom_call.1} parent=23 // pred_check
          _
        $region146: #{tpu_custom_call.1} parent=23 // pred_check_branch
          %307 = sbr.rel target = $region148
        $region147: #{tpu_custom_call.1} parent=23 // pred_region
          // Predicated region
          $region160: #{tpu_custom_call.1} parent=147 // pred_check
            _
          $region161: #{tpu_custom_call.1} parent=147 // pred_check_branch
            %323 = sbr.rel (0) target = $region163
          $region162: #{tpu_custom_call.1} parent=147 // pred_region
            %s325 = ssub.s32 2, 1
            loop: start=0, step=1, limit=1
            $region164: #{tpu_custom_call.1} parent=162 // loop_pre_header
              _
            $region165: #{tpu_custom_call.1} parent=162 // loop_header
              %s327 = sphi 0, %s331
              %p328 = scmp.ge.s32.totalorder %s327, 1
              %s332 = sphi %s303, %s303
              %s333 = sphi %s304, %s304
            $region166: #{tpu_custom_call.1} parent=162 // loop_header_branch
              %330 = sbr.rel (%p328) target = $region170
            $region167: #{tpu_custom_call.1} parent=162 // loop_body
              %v334 = vld [vmem:[%s332] sm:%s325]
              %335 = vst [vmem:[%s333] sm:%s325] %v334
            $region168: #{tpu_custom_call.1} parent=162 // loop_footer
              %s331 = sadd.s32 1, %s327
            $region169: #{tpu_custom_call.1} parent=162 // loop_footer_branch
              %326 = sbr.rel target = $region165
            $region170: #{tpu_custom_call.1} parent=162 // loop_exit
              _
          $region163: #{tpu_custom_call.1} parent=147 // pred_fallthru
            _
        $region148: #{tpu_custom_call.1} parent=23 // pred_fallthru
          _
        // Predicated region
        $region149: #{tpu_custom_call.1} parent=23 // pred_check
          _
        $region150: #{tpu_custom_call.1} parent=23 // pred_check_branch
          %309 = sbr.rel (0) target = $region152
        $region151: #{tpu_custom_call.1} parent=23 // pred_region
          %s311 = ssub.s32 2, 1
          loop: start=0, step=1, limit=1
          $region153: #{tpu_custom_call.1} parent=151 // loop_pre_header
            _
          $region154: #{tpu_custom_call.1} parent=151 // loop_header
            %s313 = sphi 0, %s317
            %p314 = scmp.ge.s32.totalorder %s313, 1
            %s318 = sphi %s303, %s303
            %s319 = sphi %s304, %s304
          $region155: #{tpu_custom_call.1} parent=151 // loop_header_branch
            %316 = sbr.rel (%p314) target = $region159
          $region156: #{tpu_custom_call.1} parent=151 // loop_body
            %v320 = vld [vmem:[%s318] sm:%s311]
            %321 = vst [vmem:[%s319] sm:%s311] %v320
          $region157: #{tpu_custom_call.1} parent=151 // loop_footer
            %s317 = sadd.s32 1, %s313
          $region158: #{tpu_custom_call.1} parent=151 // loop_footer_branch
            %312 = sbr.rel target = $region154
          $region159: #{tpu_custom_call.1} parent=151 // loop_exit
            _
        $region152: #{tpu_custom_call.1} parent=23 // pred_fallthru
          _
        // Predicated region
        $region171: #{tpu_custom_call.1} parent=23 // pred_check
          _
        $region172: #{tpu_custom_call.1} parent=23 // pred_check_branch
          %338 = sbr.rel (0) target = $region174
        $region173: #{tpu_custom_call.1} parent=23 // pred_region
          %339 = vsyncadd %s305, 16
        $region174: #{tpu_custom_call.1} parent=23 // pred_fallthru
          _
        %s340 = sadd.s32 %s122, 5
        %s341 = sld [smem:[#allocation5 + %s340]]
        %p342 = scmp.ge.s32.totalorder %s341, 0
        %p343 = scmp.lt.s32.totalorder %s341, 64
        %p344 = pnand %p342, %p343
        %p345 = pneg %p344
        %s346 = scalar_select %p345, %s341, 0
        %s347 = scalar_lea.vmem %s2, %s346
        %s348 = scalar_lea.vmem [#allocation2], 5
        %s349 = scalar_lea.sflag [#allocation3], 5
        // Predicated region
        $region175: #{tpu_custom_call.1} parent=23 // pred_check
          _
        $region176: #{tpu_custom_call.1} parent=23 // pred_check_branch
          %351 = sbr.rel target = $region178
        $region177: #{tpu_custom_call.1} parent=23 // pred_region
          // Predicated region
          $region190: #{tpu_custom_call.1} parent=177 // pred_check
            _
          $region191: #{tpu_custom_call.1} parent=177 // pred_check_branch
            %367 = sbr.rel (0) target = $region193
          $region192: #{tpu_custom_call.1} parent=177 // pred_region
            %s369 = ssub.s32 2, 1
            loop: start=0, step=1, limit=1
            $region194: #{tpu_custom_call.1} parent=192 // loop_pre_header
              _
            $region195: #{tpu_custom_call.1} parent=192 // loop_header
              %s371 = sphi 0, %s375
              %p372 = scmp.ge.s32.totalorder %s371, 1
              %s376 = sphi %s347, %s347
              %s377 = sphi %s348, %s348
            $region196: #{tpu_custom_call.1} parent=192 // loop_header_branch
              %374 = sbr.rel (%p372) target = $region200
            $region197: #{tpu_custom_call.1} parent=192 // loop_body
              %v378 = vld [vmem:[%s376] sm:%s369]
              %379 = vst [vmem:[%s377] sm:%s369] %v378
            $region198: #{tpu_custom_call.1} parent=192 // loop_footer
              %s375 = sadd.s32 1, %s371
            $region199: #{tpu_custom_call.1} parent=192 // loop_footer_branch
              %370 = sbr.rel target = $region195
            $region200: #{tpu_custom_call.1} parent=192 // loop_exit
              _
          $region193: #{tpu_custom_call.1} parent=177 // pred_fallthru
            _
        $region178: #{tpu_custom_call.1} parent=23 // pred_fallthru
          _
        // Predicated region
        $region179: #{tpu_custom_call.1} parent=23 // pred_check
          _
        $region180: #{tpu_custom_call.1} parent=23 // pred_check_branch
          %353 = sbr.rel (0) target = $region182
        $region181: #{tpu_custom_call.1} parent=23 // pred_region
          %s355 = ssub.s32 2, 1
          loop: start=0, step=1, limit=1
          $region183: #{tpu_custom_call.1} parent=181 // loop_pre_header
            _
          $region184: #{tpu_custom_call.1} parent=181 // loop_header
            %s357 = sphi 0, %s361
            %p358 = scmp.ge.s32.totalorder %s357, 1
            %s362 = sphi %s347, %s347
            %s363 = sphi %s348, %s348
          $region185: #{tpu_custom_call.1} parent=181 // loop_header_branch
            %360 = sbr.rel (%p358) target = $region189
          $region186: #{tpu_custom_call.1} parent=181 // loop_body
            %v364 = vld [vmem:[%s362] sm:%s355]
            %365 = vst [vmem:[%s363] sm:%s355] %v364
          $region187: #{tpu_custom_call.1} parent=181 // loop_footer
            %s361 = sadd.s32 1, %s357
          $region188: #{tpu_custom_call.1} parent=181 // loop_footer_branch
            %356 = sbr.rel target = $region184
          $region189: #{tpu_custom_call.1} parent=181 // loop_exit
            _
        $region182: #{tpu_custom_call.1} parent=23 // pred_fallthru
          _
        // Predicated region
        $region201: #{tpu_custom_call.1} parent=23 // pred_check
          _
        $region202: #{tpu_custom_call.1} parent=23 // pred_check_branch
          %382 = sbr.rel (0) target = $region204
        $region203: #{tpu_custom_call.1} parent=23 // pred_region
          %383 = vsyncadd %s349, 16
        $region204: #{tpu_custom_call.1} parent=23 // pred_fallthru
          _
        %s384 = sadd.s32 %s122, 6
        %s385 = sld [smem:[#allocation5 + %s384]]
        %p386 = scmp.ge.s32.totalorder %s385, 0
        %p387 = scmp.lt.s32.totalorder %s385, 64
        %p388 = pnand %p386, %p387
        %p389 = pneg %p388
        %s390 = scalar_select %p389, %s385, 0
        %s391 = scalar_lea.vmem %s2, %s390
        %s392 = scalar_lea.vmem [#allocation2], 6
        %s393 = scalar_lea.sflag [#allocation3], 6
        // Predicated region
        $region205: #{tpu_custom_call.1} parent=23 // pred_check
          _
        $region206: #{tpu_custom_call.1} parent=23 // pred_check_branch
          %395 = sbr.rel target = $region208
        $region207: #{tpu_custom_call.1} parent=23 // pred_region
          // Predicated region
          $region220: #{tpu_custom_call.1} parent=207 // pred_check
            _
          $region221: #{tpu_custom_call.1} parent=207 // pred_check_branch
            %411 = sbr.rel (0) target = $region223
          $region222: #{tpu_custom_call.1} parent=207 // pred_region
            %s413 = ssub.s32 2, 1
            loop: start=0, step=1, limit=1
            $region224: #{tpu_custom_call.1} parent=222 // loop_pre_header
              _
            $region225: #{tpu_custom_call.1} parent=222 // loop_header
              %s415 = sphi 0, %s419
              %p416 = scmp.ge.s32.totalorder %s415, 1
              %s420 = sphi %s391, %s391
              %s421 = sphi %s392, %s392
            $region226: #{tpu_custom_call.1} parent=222 // loop_header_branch
              %418 = sbr.rel (%p416) target = $region230
            $region227: #{tpu_custom_call.1} parent=222 // loop_body
              %v422 = vld [vmem:[%s420] sm:%s413]
              %423 = vst [vmem:[%s421] sm:%s413] %v422
            $region228: #{tpu_custom_call.1} parent=222 // loop_footer
              %s419 = sadd.s32 1, %s415
            $region229: #{tpu_custom_call.1} parent=222 // loop_footer_branch
              %414 = sbr.rel target = $region225
            $region230: #{tpu_custom_call.1} parent=222 // loop_exit
              _
          $region223: #{tpu_custom_call.1} parent=207 // pred_fallthru
            _
        $region208: #{tpu_custom_call.1} parent=23 // pred_fallthru
          _
        // Predicated region
        $region209: #{tpu_custom_call.1} parent=23 // pred_check
          _
        $region210: #{tpu_custom_call.1} parent=23 // pred_check_branch
          %397 = sbr.rel (0) target = $region212
        $region211: #{tpu_custom_call.1} parent=23 // pred_region
          %s399 = ssub.s32 2, 1
          loop: start=0, step=1, limit=1
          $region213: #{tpu_custom_call.1} parent=211 // loop_pre_header
            _
          $region214: #{tpu_custom_call.1} parent=211 // loop_header
            %s401 = sphi 0, %s405
            %p402 = scmp.ge.s32.totalorder %s401, 1
            %s406 = sphi %s391, %s391
            %s407 = sphi %s392, %s392
          $region215: #{tpu_custom_call.1} parent=211 // loop_header_branch
            %404 = sbr.rel (%p402) target = $region219
          $region216: #{tpu_custom_call.1} parent=211 // loop_body
            %v408 = vld [vmem:[%s406] sm:%s399]
            %409 = vst [vmem:[%s407] sm:%s399] %v408
          $region217: #{tpu_custom_call.1} parent=211 // loop_footer
            %s405 = sadd.s32 1, %s401
          $region218: #{tpu_custom_call.1} parent=211 // loop_footer_branch
            %400 = sbr.rel target = $region214
          $region219: #{tpu_custom_call.1} parent=211 // loop_exit
            _
        $region212: #{tpu_custom_call.1} parent=23 // pred_fallthru
          _
        // Predicated region
        $region231: #{tpu_custom_call.1} parent=23 // pred_check
          _
        $region232: #{tpu_custom_call.1} parent=23 // pred_check_branch
          %426 = sbr.rel (0) target = $region234
        $region233: #{tpu_custom_call.1} parent=23 // pred_region
          %427 = vsyncadd %s393, 16
        $region234: #{tpu_custom_call.1} parent=23 // pred_fallthru
          _
        %s428 = sadd.s32 %s122, 7
        %s429 = sld [smem:[#allocation5 + %s428]]
        %p430 = scmp.ge.s32.totalorder %s429, 0
        %p431 = scmp.lt.s32.totalorder %s429, 64
        %p432 = pnand %p430, %p431
        %p433 = pneg %p432
        %s434 = scalar_select %p433, %s429, 0
        %s435 = scalar_lea.vmem %s2, %s434
        %s436 = scalar_lea.vmem [#allocation2], 7
        %s437 = scalar_lea.sflag [#allocation3], 7
        // Predicated region
        $region235: #{tpu_custom_call.1} parent=23 // pred_check
          _
        $region236: #{tpu_custom_call.1} parent=23 // pred_check_branch
          %439 = sbr.rel target = $region238
        $region237: #{tpu_custom_call.1} parent=23 // pred_region
          // Predicated region
          $region250: #{tpu_custom_call.1} parent=237 // pred_check
            _
          $region251: #{tpu_custom_call.1} parent=237 // pred_check_branch
            %455 = sbr.rel (0) target = $region253
          $region252: #{tpu_custom_call.1} parent=237 // pred_region
            %s457 = ssub.s32 2, 1
            loop: start=0, step=1, limit=1
            $region254: #{tpu_custom_call.1} parent=252 // loop_pre_header
              _
            $region255: #{tpu_custom_call.1} parent=252 // loop_header
              %s459 = sphi 0, %s463
              %p460 = scmp.ge.s32.totalorder %s459, 1
              %s464 = sphi %s435, %s435
              %s465 = sphi %s436, %s436
            $region256: #{tpu_custom_call.1} parent=252 // loop_header_branch
              %462 = sbr.rel (%p460) target = $region260
            $region257: #{tpu_custom_call.1} parent=252 // loop_body
              %v466 = vld [vmem:[%s464] sm:%s457]
              %467 = vst [vmem:[%s465] sm:%s457] %v466
            $region258: #{tpu_custom_call.1} parent=252 // loop_footer
              %s463 = sadd.s32 1, %s459
            $region259: #{tpu_custom_call.1} parent=252 // loop_footer_branch
              %458 = sbr.rel target = $region255
            $region260: #{tpu_custom_call.1} parent=252 // loop_exit
              _
          $region253: #{tpu_custom_call.1} parent=237 // pred_fallthru
            _
        $region238: #{tpu_custom_call.1} parent=23 // pred_fallthru
          _
        // Predicated region
        $region239: #{tpu_custom_call.1} parent=23 // pred_check
          _
        $region240: #{tpu_custom_call.1} parent=23 // pred_check_branch
          %441 = sbr.rel (0) target = $region242
        $region241: #{tpu_custom_call.1} parent=23 // pred_region
          %s443 = ssub.s32 2, 1
          loop: start=0, step=1, limit=1
          $region243: #{tpu_custom_call.1} parent=241 // loop_pre_header
            _
          $region244: #{tpu_custom_call.1} parent=241 // loop_header
            %s445 = sphi 0, %s449
            %p446 = scmp.ge.s32.totalorder %s445, 1
            %s450 = sphi %s435, %s435
            %s451 = sphi %s436, %s436
          $region245: #{tpu_custom_call.1} parent=241 // loop_header_branch
            %448 = sbr.rel (%p446) target = $region249
          $region246: #{tpu_custom_call.1} parent=241 // loop_body
            %v452 = vld [vmem:[%s450] sm:%s443]
            %453 = vst [vmem:[%s451] sm:%s443] %v452
          $region247: #{tpu_custom_call.1} parent=241 // loop_footer
            %s449 = sadd.s32 1, %s445
          $region248: #{tpu_custom_call.1} parent=241 // loop_footer_branch
            %444 = sbr.rel target = $region244
          $region249: #{tpu_custom_call.1} parent=241 // loop_exit
            _
        $region242: #{tpu_custom_call.1} parent=23 // pred_fallthru
          _
        // Predicated region
        $region261: #{tpu_custom_call.1} parent=23 // pred_check
          _
        $region262: #{tpu_custom_call.1} parent=23 // pred_check_branch
          %470 = sbr.rel (0) target = $region264
        $region263: #{tpu_custom_call.1} parent=23 // pred_region
          %471 = vsyncadd %s437, 16
        $region264: #{tpu_custom_call.1} parent=23 // pred_fallthru
          _
        %s472 = smul.u32 1, 1
        %s473 = sshll.u32 %s472, 4
        %474 = dma.done [#allocation3], %s473
        %s475 = sshll.u32 %s472, 4
        %476 = dma.done %s173, %s475
        %s477 = sshll.u32 %s472, 4
        %478 = dma.done %s217, %s477
        %s479 = sshll.u32 %s472, 4
        %480 = dma.done %s261, %s479
        %s481 = sshll.u32 %s472, 4
        %482 = dma.done %s305, %s481
        %s483 = sshll.u32 %s472, 4
        %484 = dma.done %s349, %s483
        %s485 = sshll.u32 %s472, 4
        %486 = dma.done %s393, %s485
        %s487 = sshll.u32 %s472, 4
        %488 = dma.done %s437, %s487
        %v489 = vld [vmem:[%s121] sm:$0xff]
        %vm490 = vcmp.ge.s32.totalorder %v489, 0
        %vm491 = vcmp.lt.s32.totalorder %v489, 64
        %vm492 = vmand %vm490, %vm491
        %v493 = vld [vmem:[#allocation2] sm:$0xff]
        %v494 = vsel %vm492, 1, 0
        %495 = vset.pattern.permute.xlu0 0
        %496 = vperm.xlu0 %495, %v494
        %v497 = vpop.permute.xlu0 %496
        %vm498 = vcmp.eq.s32.totalorder %v497, 1
        %v499 = vsel %vm498, %v493, 0.0
        %vm500 = vcmask 261120
        %501 = vst.msk [vmem:[%s117] sm:$0xff] %vm500, %v499
        %s502 = sand.u32 %s59, 1
        %s503 = scalar_lea.sflag [#allocation7], %s502
        %s504 = sand.u32 %s59, 1
        %s505 = smul.addr %s504, 8
        %s506 = scalar_lea.vmem [#allocation6], %s505
        // Predicated region
        $region265: #{tpu_custom_call.1} parent=23 // pred_check
          %p507 = pneg %p69
        $region266: #{tpu_custom_call.1} parent=23 // pred_check_branch
          %509 = sbr.rel (%p507) target = $region268
        $region267: #{tpu_custom_call.1} parent=23 // pred_region
          %511 = vsyncadd %s503, 0
          %s512 = smul.addr %s25, 8
          %s513 = scalar_lea.hbm %s3, %s512
          %s515 = sshll.u32 %s506, 4
          %s516 = int_to_ptr.vmem [resolvable:$true] %s515
          %s517 = sshll.u32 %s513, 4
          %s518 = int_to_ptr.hbm [resolvable:$true] %s517
          %520 = dma.vmem_to_hbm [thread:$0]  %s516, 128, %s518, %s503
        $region268: #{tpu_custom_call.1} parent=23 // pred_fallthru
          _
      $region24: #{tpu_custom_call.1} parent=5 // pred_fallthru
        _
      %p521 = scmp.le.s32.totalorder 2, %s20
      // Predicated region
      $region269: #{tpu_custom_call.1} parent=5 // pred_check
        %p522 = pneg %p521
      $region270: #{tpu_custom_call.1} parent=5 // pred_check_branch
        %524 = sbr.rel (%p522) target = $region272
      $region271: #{tpu_custom_call.1} parent=5 // pred_region
        %s525 = ssub.s32 %s20, 2
        // Predicated region
        $region273: #{tpu_custom_call.1} parent=271 // pred_check
          %p526 = pneg %p75
        $region274: #{tpu_custom_call.1} parent=271 // pred_check_branch
          %528 = sbr.rel (%p526) target = $region276
        $region275: #{tpu_custom_call.1} parent=271 // pred_region
          %s529 = sand.u32 %s60, 1
          %s530 = scalar_lea.sflag [#allocation7], %s529
          %s531 = sand.u32 %s60, 1
          %s532 = smul.addr %s531, 8
          %s533 = scalar_lea.vmem [#allocation6], %s532
          %535 = dma.done %s530, 128
        $region276: #{tpu_custom_call.1} parent=271 // pred_fallthru
          _
      $region272: #{tpu_custom_call.1} parent=5 // pred_fallthru
        _
    $region6: #{tpu_custom_call.1} parent=1 // loop_footer
      %s24 = sadd.s32 1, %s20
    $region7: #{tpu_custom_call.1} parent=1 // loop_footer_branch
      %19 = sbr.rel target = $region3
    $region8: #{tpu_custom_call.1} parent=1 // loop_exit
      _
    %536 = vsyncpa [#allocation7], 1
    %s537 = scalar_lea.sflag [#allocation7], 1
    %538 = vsyncpa %s537, 1
  %539 = vsyncmov [#allocation3]
  %s540 = vpop.sfrf %539
  %p541 = scmp.eq.s32.totalorder %s540, 0
  %p542 = pneg %p541
  %544 = shalt.err (%p542)
  %s545 = scalar_lea.sflag [#allocation3], 1
  %546 = vsyncmov %s545
  %s547 = vpop.sfrf %546
  %p548 = scmp.eq.s32.totalorder %s547, 0
  %p549 = pneg %p548
  %551 = shalt.err (%p549)
  %s552 = scalar_lea.sflag [#allocation3], 2
  %553 = vsyncmov %s552
  %s554 = vpop.sfrf %553
  %p555 = scmp.eq.s32.totalorder %s554, 0
  %p556 = pneg %p555
  %558 = shalt.err (%p556)
  %s559 = scalar_lea.sflag [#allocation3], 3
  %560 = vsyncmov %s559
  %s561 = vpop.sfrf %560
  %p562 = scmp.eq.s32.totalorder %s561, 0
  %p563 = pneg %p562
  %565 = shalt.err (%p563)
  %s566 = scalar_lea.sflag [#allocation3], 4
  %567 = vsyncmov %s566
  %s568 = vpop.sfrf %567
  %p569 = scmp.eq.s32.totalorder %s568, 0
  %p570 = pneg %p569
  %572 = shalt.err (%p570)
  %s573 = scalar_lea.sflag [#allocation3], 5
  %574 = vsyncmov %s573
  %s575 = vpop.sfrf %574
  %p576 = scmp.eq.s32.totalorder %s575, 0
  %p577 = pneg %p576
  %579 = shalt.err (%p577)
  %s580 = scalar_lea.sflag [#allocation3], 6
  %581 = vsyncmov %s580
  %s582 = vpop.sfrf %581
  %p583 = scmp.eq.s32.totalorder %s582, 0
  %p584 = pneg %p583
  %586 = shalt.err (%p584)
  %s587 = scalar_lea.sflag [#allocation3], 7
  %588 = vsyncmov %s587
  %s589 = vpop.sfrf %588
  %p590 = scmp.eq.s32.totalorder %s589, 0
  %p591 = pneg %p590
  %593 = shalt.err (%p591)

</llo_original>
